<compile_context>
chip_gen: v7x
topology: tpu7x:2x2x1
jax: 0.10.0
libtpu: 0.0.40
codegen_flags: <defaults>
</compile_context>

<pallas_src>
import math
import functools

import jax
import jax.numpy as jnp
from jax import lax
from jax.experimental import pallas as pl
from jax.experimental.pallas import tpu as pltpu


_TARGET_BLOCK_BYTES = 1 << 20  # ~1 MiB per x/out block: near HBM roofline, VMEM-safe on v5e/v6e/v7x


# ----------------------------------------------------------------------------
# In-kernel sinusoidal PE value (runs on VPU + EUP; no HBM traffic).
# pe[t, d] = sin(t * exp(-(2*(d//2)) * ln(1e4)/D))   if d even
#          = cos( same angle )                        if d odd
# ----------------------------------------------------------------------------
def _pe_value(t_idx_i32, d_idx_i32, embed_dim):
    scale = -math.log(10000.0) / float(embed_dim)
    d_even = (d_idx_i32 >> 1) << 1                       # 2 * (d // 2)
    inv_freq = jnp.exp(d_even.astype(jnp.float32) * scale)
    angle = t_idx_i32.astype(jnp.float32) * inv_freq
    return jnp.where((d_idx_i32 & 1) == 0, jnp.sin(angle), jnp.cos(angle))


# ----------------------------------------------------------------------------
# Kernels
# ----------------------------------------------------------------------------
def _pe_btd_kernel(x_ref, o_ref, *, rows_per_block, embed_dim):
    # x_ref: (1, TT, D) block of x in (B, T, D) layout.
    t0 = pl.program_id(1) * rows_per_block
    shape = x_ref.shape
    t_idx = t0 + lax.broadcasted_iota(jnp.int32, shape, 1)
    d_idx = lax.broadcasted_iota(jnp.int32, shape, 2)
    pe = _pe_value(t_idx, d_idx, embed_dim)
    o_ref[...] = x_ref[...] + pe.astype(x_ref.dtype)


def _pe_bdt_kernel(x_ref, o_ref, *, lanes_per_block, embed_dim):
    # x_ref: (1, D, TT) block of x in (B, D, T) layout (time on the lane axis).
    t0 = pl.program_id(1) * lanes_per_block
    shape = x_ref.shape
    d_idx = lax.broadcasted_iota(jnp.int32, shape, 1)
    t_idx = t0 + lax.broadcasted_iota(jnp.int32, shape, 2)
    pe = _pe_value(t_idx, d_idx, embed_dim)
    o_ref[...] = x_ref[...] + pe.astype(x_ref.dtype)


def _pe_btd_folded_kernel(x_ref, o_ref, *, rows_per_block, embed_dim, fold, d_shift):
    # x_ref: (1, TT, fold*D) block of x viewed as (B, T//fold, fold*D).
    # Lane-dense path for D < 128: lane c maps to (t_local, d) = (c >> d_shift, c & (D-1)).
    r0 = pl.program_id(1) * rows_per_block
    shape = x_ref.shape
    row = r0 + lax.broadcasted_iota(jnp.int32, shape, 1)
    lane = lax.broadcasted_iota(jnp.int32, shape, 2)
    t_idx = row * fold + (lane >> d_shift)
    d_idx = lane & (embed_dim - 1)                       # embed_dim is a power of 2 here
    pe = _pe_value(t_idx, d_idx, embed_dim)
    o_ref[...] = x_ref[...] + pe.astype(x_ref.dtype)


# ----------------------------------------------------------------------------
# Tiling helpers
# ----------------------------------------------------------------------------
def _block_rows(total_rows, row_bytes, *, align):
    """Row-tile: multiple of `align`, ~_TARGET_BLOCK_BYTES per block, capped at total."""
    rows = max(1, _TARGET_BLOCK_BYTES // max(int(row_bytes), 1))
    rows = max(align, (rows // align) * align)
    if rows >= total_rows:
        return int(total_rows)          # full extent: always a legal block dim
    return int(rows)


def _fold_factor(seq_len, embed_dim):
    """Largest k so (k*D) is a lane-dense multiple of 128 (<=512) and k | T."""
    if embed_dim >= 128 or embed_dim <= 0 or 128 % embed_dim != 0:
        return 1
    for lanes in (512, 256, 128):
        k = lanes // embed_dim
        if k >= 1 and seq_len % k == 0:
            return k
    return 1


def _grid_params():
    return pltpu.CompilerParams(dimension_semantics=("parallel", "parallel"))


# ----------------------------------------------------------------------------
# pallas_call wrappers (one per layout / folding mode)
# ----------------------------------------------------------------------------
@functools.partial(jax.jit, static_argnames=("embed_dim",))
def _pe_forward_btd(x, *, embed_dim):
    B, T, D = x.shape
    tt = _block_rows(T, D * x.dtype.itemsize, align=64)
    kernel = functools.partial(_pe_btd_kernel, rows_per_block=tt, embed_dim=embed_dim)
    return pl.pallas_call(
        kernel,
        out_shape=jax.ShapeDtypeStruct((B, T, D), x.dtype),
        grid_spec=pltpu.PrefetchScalarGridSpec(
            num_scalar_prefetch=0,
            grid=(B, pl.cdiv(T, tt)),
            in_specs=[pl.BlockSpec((1, tt, D), lambda b, t: (b, t, 0))],
            out_specs=pl.BlockSpec((1, tt, D), lambda b, t: (b, t, 0)),
        ),
        compiler_params=_grid_params(),
    )(x)


@functools.partial(jax.jit, static_argnames=("embed_dim",))
def _pe_forward_bdt(x, *, embed_dim):
    B, D, T = x.shape
    tt = _block_rows(T, D * x.dtype.itemsize, align=128)   # lane axis: multiple of 128
    kernel = functools.partial(_pe_bdt_kernel, lanes_per_block=tt, embed_dim=embed_dim)
    return pl.pallas_call(
        kernel,
        out_shape=jax.ShapeDtypeStruct((B, D, T), x.dtype),
        grid_spec=pltpu.PrefetchScalarGridSpec(
            num_scalar_prefetch=0,
            grid=(B, pl.cdiv(T, tt)),
            in_specs=[pl.BlockSpec((1, D, tt), lambda b, t: (b, 0, t))],
            out_specs=pl.BlockSpec((1, D, tt), lambda b, t: (b, 0, t)),
        ),
        compiler_params=_grid_params(),
    )(x)


@functools.partial(jax.jit, static_argnames=("embed_dim", "fold"))
def _pe_forward_btd_folded(x, *, embed_dim, fold):
    B, T, D = x.shape
    rows, lanes = T // fold, fold * D
    xf = x.reshape(B, rows, lanes)      # free reshape: contiguous trailing-dim merge
    tt = _block_rows(rows, lanes * x.dtype.itemsize, align=64)
    d_shift = int(embed_dim).bit_length() - 1
    kernel = functools.partial(_pe_btd_folded_kernel, rows_per_block=tt,
                               embed_dim=embed_dim, fold=fold, d_shift=d_shift)
    out = pl.pallas_call(
        kernel,
        out_shape=jax.ShapeDtypeStruct((B, rows, lanes), x.dtype),
        grid_spec=pltpu.PrefetchScalarGridSpec(
            num_scalar_prefetch=0,
            grid=(B, pl.cdiv(rows, tt)),
            in_specs=[pl.BlockSpec((1, tt, lanes), lambda b, r: (b, r, 0))],
            out_specs=pl.BlockSpec((1, tt, lanes), lambda b, r: (b, r, 0)),
        ),
        compiler_params=_grid_params(),
    )(xf)
    return out.reshape(B, T, D)


# ----------------------------------------------------------------------------
# Module wrapper
# ----------------------------------------------------------------------------
class PositionalEncodingPallas:
    """JAX/Pallas version of the PyTorch PositionalEncoding module (eval mode)."""

    def __init__(self, embed_dim: int, dropout: float = 0.1, max_len: int = 10000):
        self.embed_dim = int(embed_dim)
        self.dropout_p = dropout        # identity in eval mode
        self.max_len = int(max_len)

    def __call__(self, x: jnp.ndarray) -> jnp.ndarray:
        if x.ndim != 3:
            raise ValueError("Expected input of shape (B, T, D) or (B, D, T)")
        D = self.embed_dim
        # Same layout-detection rule as the PyTorch module (ambiguous iff T == D).
        batch_first = x.shape[1] != D
        if batch_first:
            if x.shape[2] != D:
                raise ValueError("Last dim must equal embed_dim for (B, T, D) input")
            T = x.shape[1]
        else:
            T = x.shape[2]
        if T > self.max_len:
            raise ValueError("Sequence length exceeds max_len")

        if batch_first:
            fold = _fold_factor(T, D)
            if fold > 1:
                return _pe_forward_btd_folded(x, embed_dim=D, fold=fold)
            return _pe_forward_btd(x, embed_dim=D)
        # (B, D, T): handled natively, no transposes.
        return _pe_forward_bdt(x, embed_dim=D)


# ----------------------------------------------------------------------------
# Reference (plain JAX) for correctness checks.
# ----------------------------------------------------------------------------
def _build_pe_table(embed_dim: int, max_len: int) -> jnp.ndarray:
    position = jnp.arange(max_len, dtype=jnp.float32)[:, None]
    div_term = jnp.exp(jnp.arange(0, embed_dim, 2, dtype=jnp.float32)
                       * (-math.log(10000.0) / embed_dim))
    angles = position * div_term
    pe = jnp.zeros((max_len, embed_dim), dtype=jnp.float32)
    pe = pe.at[:, 0::2].set(jnp.sin(angles))
    pe = pe.at[:, 1::2].set(jnp.cos(angles))
    return pe


if __name__ == "__main__":
    key = jax.random.PRNGKey(0)
    k1, k2, k3 = jax.random.split(key, 3)

    # Case 1: (B, T, D) with small power-of-two D -> lane-dense folded kernel.
    B, T, D = 2, 8, 32
    module = PositionalEncodingPallas(embed_dim=D, dropout=0.1, max_len=10000)
    x_btd = jax.random.normal(k1, (B, T, D), dtype=jnp.float32)
    out_btd = jax.block_until_ready(module(x_btd))

    # Case 2: (B, D, T) layout -> native BDT kernel (no wrapper transposes).
    x_bdt = jax.random.normal(k2, (B, D, T), dtype=jnp.float32)
    out_bdt = jax.block_until_ready(module(x_bdt))

    # Case 3: (B, T, D) with D that is not foldable -> general BTD kernel.
    B3, T3, D3 = 2, 16, 48
    module3 = PositionalEncodingPallas(embed_dim=D3, dropout=0.1, max_len=10000)
    x3 = jax.random.normal(k3, (B3, T3, D3), dtype=jnp.float32)
    out3 = jax.block_until_ready(module3(x3))

    # Plain-JAX references.
    pe = _build_pe_table(D, 10000)
    pe3 = _build_pe_table(D3, 10000)
    ref_btd = x_btd + pe[:T, :][None, :, :]
    ref_bdt = x_bdt + jnp.transpose(pe[:T, :])[None, :, :]
    ref3 = x3 + pe3[:T3, :][None, :, :]

    assert out_btd.shape == (B, T, D) and out_btd.dtype == x_btd.dtype
    assert out_bdt.shape == (B, D, T) and out_bdt.dtype == x_bdt.dtype
    assert out3.shape == (B3, T3, D3) and out3.dtype == x3.dtype
    assert jnp.allclose(out_btd, ref_btd, atol=1e-5, rtol=1e-5)
    assert jnp.allclose(out_bdt, ref_bdt, atol=1e-5, rtol=1e-5)
    assert jnp.allclose(out3, ref3, atol=1e-5, rtol=1e-5)

    print("KERNEL_OK")
</pallas_src>

<mosaic_0001>
module attributes {stable_mosaic.version = 11 : i64} {
  func.func @_pe_btd_folded_kernel(%arg0: i32, %arg1: i32, %arg2: memref<1x1x256xf32, #tpu.memory_space<vmem>>, %arg3: memref<1x1x256xf32, #tpu.memory_space<vmem>>) attributes {dimension_semantics = [#tpu.dimension_semantics<parallel>, #tpu.dimension_semantics<parallel>], iteration_bounds = array<i64: 2, 1>, scalar_prefetch = 0 : i64, scratch_operands = 0 : i64, tpu.core_type = #tpu.core_type<tc>, window_params = [{transform_indices = @transform_0, window_bounds = array<i64: 1, 1, 256>}, {transform_indices = @transform_1, window_bounds = array<i64: 1, 1, 256>}]} {
    %c1_i32 = arith.constant 1 : i32
    %0 = arith.muli %arg1, %c1_i32 : i32
    %1 = tpu.iota {dimensions = array<i32: 1>} : vector<1x1x256xi32>
    %2 = vector.broadcast %0 : i32 to vector<1x1x256xi32>
    %3 = arith.addi %2, %1 : vector<1x1x256xi32>
    %4 = tpu.iota {dimensions = array<i32: 2>} : vector<1x1x256xi32>
    %c8_i32 = arith.constant 8 : i32
    %5 = vector.broadcast %c8_i32 : i32 to vector<1x1x256xi32>
    %6 = arith.muli %3, %5 : vector<1x1x256xi32>
    %c5_i32 = arith.constant 5 : i32
    %7 = vector.broadcast %c5_i32 : i32 to vector<1x1x256xi32>
    %8 = arith.shrsi %4, %7 : vector<1x1x256xi32>
    %9 = arith.addi %6, %8 : vector<1x1x256xi32>
    %c31_i32 = arith.constant 31 : i32
    %10 = vector.broadcast %c31_i32 : i32 to vector<1x1x256xi32>
    %11 = arith.andi %4, %10 : vector<1x1x256xi32>
    %c1_i32_0 = arith.constant 1 : i32
    %12 = vector.broadcast %c1_i32_0 : i32 to vector<1x1x256xi32>
    %13 = arith.shrsi %11, %12 : vector<1x1x256xi32>
    %c1_i32_1 = arith.constant 1 : i32
    %14 = vector.broadcast %c1_i32_1 : i32 to vector<1x1x256xi32>
    %15 = arith.shli %13, %14 : vector<1x1x256xi32>
    %16 = arith.sitofp %15 : vector<1x1x256xi32> to vector<1x1x256xf32>
    %cst = arith.constant -0.287823141 : f32
    %17 = vector.broadcast %cst : f32 to vector<1x1x256xf32>
    %18 = arith.mulf %16, %17 : vector<1x1x256xf32>
    %19 = math.exp %18 : vector<1x1x256xf32>
    %20 = arith.sitofp %9 : vector<1x1x256xi32> to vector<1x1x256xf32>
    %21 = arith.mulf %20, %19 : vector<1x1x256xf32>
    %c1_i32_2 = arith.constant 1 : i32
    %22 = vector.broadcast %c1_i32_2 : i32 to vector<1x1x256xi32>
    %23 = arith.andi %11, %22 : vector<1x1x256xi32>
    %c0_i32 = arith.constant 0 : i32
    %24 = vector.broadcast %c0_i32 : i32 to vector<1x1x256xi32>
    %25 = arith.cmpi eq, %23, %24 : vector<1x1x256xi32>
    %26 = math.sin %21 : vector<1x1x256xf32>
    %27 = math.cos %21 : vector<1x1x256xf32>
    %28 = arith.select %25, %26, %27 : vector<1x1x256xi1>, vector<1x1x256xf32>
    %c0 = arith.constant 0 : index
    %c0_3 = arith.constant 0 : index
    %c0_4 = arith.constant 0 : index
    %29 = vector.load %arg2[%c0, %c0_3, %c0_4] : memref<1x1x256xf32, #tpu.memory_space<vmem>>, vector<1x1x256xf32>
    %30 = arith.addf %29, %28 : vector<1x1x256xf32>
    %c0_5 = arith.constant 0 : index
    %c0_6 = arith.constant 0 : index
    %c0_7 = arith.constant 0 : index
    %31 = vector.load %arg3[%c0_5, %c0_6, %c0_7] : memref<1x1x256xf32, #tpu.memory_space<vmem>>, vector<1x1x256xf32>
    tpu.vector_store %arg3[%c0_5, %c0_6, %c0_7], %30 {strides = array<i32>} : memref<1x1x256xf32, #tpu.memory_space<vmem>>, vector<1x1x256xf32>,
    return
  }
  func.func @transform_0(%arg0: i32, %arg1: i32) -> (i32, i32, i32) {
    %c0_i32 = arith.constant 0 : i32
    %c0_i32_0 = arith.constant 0 : i32
    return %arg0, %arg1, %c0_i32 : i32, i32, i32
  }
  func.func @transform_1(%arg0: i32, %arg1: i32) -> (i32, i32, i32) {
    %c0_i32 = arith.constant 0 : i32
    %c0_i32_0 = arith.constant 0 : i32
    return %arg0, %arg1, %c0_i32 : i32, i32, i32
  }
}

</mosaic_0001>

<llo_original>
// kernel: _pe_forward_btd_folded.1
$region0: #{_pe_forward_btd_folded.1}
  #allocation0 [shape = 'u32[]', space=smem, size = 0x4, offset = 0x4, fixed_abs, tag = 'smem constant byte address 0x4 - core index']
  #allocation1 [shape = 'u32[144,128]{1,0:T(1,128)}', space=vmem, size = 0x12000, scoped, tag = 'internal scratch']
  %s0 = inlined_call_operand.vmem [shape: f32[2,1,256], index: 0, kind: input, shape index: {}]
  %s1 = inlined_call_operand.vmem [shape: f32[2,1,256], index: 1, kind: output, shape index: {}]
  %s2 = sld [smem:[#allocation0]]
  $region37: #{_pe_forward_btd_folded.1} parent=0
    _
  %s4 = ssub.s32 1, %s2
  %s5 = scalar_select 0, %s4, %s2
  loop: start=0, step=1, limit=4
  $region2: #{_pe_forward_btd_folded.1} parent=0 // loop_pre_header
    _
  $region3: #{_pe_forward_btd_folded.1} parent=0 // loop_header
    %s7 = sphi 0, %s11
    %p8 = scmp.ge.s32.totalorder %s7, 4
    %s14 = sphi 0, %s26
    %s15 = sphi 0, %s22
    %s16 = sphi 0, %s14
    %s17 = sphi 0, %s15
    %s18 = sphi 0, %s16
    %s19 = sphi 0, %s17
    %s31 = sphi 0, %s33
    %s34 = sphi 0, %s31
    %s35 = sphi 0, %s34
    %s51 = sphi 0, %s35
    %s59 = sphi 0, %s61
    %s62 = sphi 0, %s59
    %s63 = sphi 0, %s62
    %s79 = sphi 0, %s63
  $region4: #{_pe_forward_btd_folded.1} parent=0 // loop_header_branch
    %10 = sbr.rel (%p8) target = $region8
  $region5: #{_pe_forward_btd_folded.1} parent=0 // loop_body
    %s12 = ssub.s32 %s7, 1
    %s13 = ssub.s32 %s7, 2
    %s20 = sadd.s32 1, %s15
    %p21 = scmp.ge.s32.totalorder %s20, 1
    %s22 = scalar_select %p21, 0, %s20
    %s23 = sadd.s32 1, %s14
    %s24 = scalar_select %p21, %s23, %s14
    %p25 = scmp.ge.s32.totalorder %s24, 2
    %s26 = scalar_select %p25, 0, %s24
    %s27 = ssub.s32 %s14, %s26
    %s28 = ssub.s32 %s15, %s22
    %s29 = sor.u32 %s27, %s28
    %p30 = scmp.eq.s32.totalorder %s29, 0
    %s32 = sadd.s32 %s31, 1
    %s33 = scalar_select %p30, %s31, %s32
    %p36 = pneg %p30
    %p37 = scmp.eq.s32.totalorder %s7, 1
    %p38 = por %p36, %p37
    %p39 = scmp.ne.s32.totalorder %s31, %s34
    %p40 = scmp.eq.s32.totalorder %s7, 0
    %p41 = por %p39, %p40
    %p42 = scmp.ne.s32.totalorder %s31, %s34
    %p43 = scmp.eq.s32.totalorder %s12, 1
    %p44 = por %p42, %p43
    %p45 = scmp.ne.s32.totalorder %s34, %s35
    %p46 = scmp.eq.s32.totalorder %s12, 0
    %p47 = por %p45, %p46
    %p48 = scmp.ne.s32.totalorder %s34, %s35
    %p49 = scmp.eq.s32.totalorder %s13, 1
    %p50 = por %p48, %p49
    %p52 = scmp.ne.s32.totalorder %s35, %s51
    %p53 = scmp.eq.s32.totalorder %s13, 0
    %p54 = por %p52, %p53
    %s55 = ssub.s32 %s14, %s26
    %s56 = ssub.s32 %s15, %s22
    %s57 = sor.u32 %s55, %s56
    %p58 = scmp.eq.s32.totalorder %s57, 0
    %s60 = sadd.s32 %s59, 1
    %s61 = scalar_select %p58, %s59, %s60
    %p64 = pneg %p58
    %p65 = scmp.eq.s32.totalorder %s7, 1
    %p66 = por %p64, %p65
    %p67 = scmp.ne.s32.totalorder %s59, %s62
    %p68 = scmp.eq.s32.totalorder %s7, 0
    %p69 = por %p67, %p68
    %p70 = scmp.ne.s32.totalorder %s59, %s62
    %p71 = scmp.eq.s32.totalorder %s12, 1
    %p72 = por %p70, %p71
    %p73 = scmp.ne.s32.totalorder %s62, %s63
    %p74 = scmp.eq.s32.totalorder %s12, 0
    %p75 = por %p73, %p74
    %p76 = scmp.ne.s32.totalorder %s62, %s63
    %p77 = scmp.eq.s32.totalorder %s13, 1
    %p78 = por %p76, %p77
    %p80 = scmp.ne.s32.totalorder %s63, %s79
    %p81 = scmp.eq.s32.totalorder %s13, 0
    %p82 = por %p80, %p81
    %p83 = scmp.le.s32.totalorder 1, %s7
    %p84 = scmp.lt.s32.totalorder %s7, 3
    %p85 = pnand %p83, %p84
    %p86 = pneg %p85
    // Predicated region
    $region9: #{_pe_forward_btd_folded.1} parent=5 // pred_check
      _
    $region10: #{_pe_forward_btd_folded.1} parent=5 // pred_check_branch
      %88 = sbr.rel (%p85) target = $region12
    $region11: #{_pe_forward_btd_folded.1} parent=5 // pred_region
      %s89 = ssub.s32 %s7, 1
    $region12: #{_pe_forward_btd_folded.1} parent=5 // pred_fallthru
      _
    %p90 = scmp.lt.s32.totalorder %s7, 2
    // Predicated region
    $region13: #{_pe_forward_btd_folded.1} parent=5 // pred_check
      %p91 = pneg %p90
    $region14: #{_pe_forward_btd_folded.1} parent=5 // pred_check_branch
      %93 = sbr.rel (%p91) target = $region16
    $region15: #{_pe_forward_btd_folded.1} parent=5 // pred_region
      // Predicated region
      $region17: #{_pe_forward_btd_folded.1} parent=15 // pred_check
        %p94 = pneg %p41
      $region18: #{_pe_forward_btd_folded.1} parent=15 // pred_check_branch
        %96 = sbr.rel (%p94) target = $region20
      $region19: #{_pe_forward_btd_folded.1} parent=15 // pred_region
        %p97 = scmp.lt.s32.totalorder %s14, 1
        %s98 = scalar_select %p97, %s14, 1
        %p99 = scmp.lt.s32.totalorder %s15, 0
        %s100 = scalar_select %p99, %s15, 0
        %s101 = smul.addr %s100, 2
        %s102 = smul.addr %s98, 2
        %s103 = sadd.s32 %s101, %s102
        %s104 = scalar_lea.vmem %s0, %s103
      $region20: #{_pe_forward_btd_folded.1} parent=15 // pred_fallthru
        _
    $region16: #{_pe_forward_btd_folded.1} parent=5 // pred_fallthru
      _
    %p105 = scmp.le.s32.totalorder 1, %s7
    %p106 = scmp.lt.s32.totalorder %s7, 3
    %p107 = pnand %p105, %p106
    %p108 = pneg %p107
    // Predicated region
    $region21: #{_pe_forward_btd_folded.1} parent=5 // pred_check
      _
    $region22: #{_pe_forward_btd_folded.1} parent=5 // pred_check_branch
      %110 = sbr.rel (%p107) target = $region24
    $region23: #{_pe_forward_btd_folded.1} parent=5 // pred_region
      %s111 = ssub.s32 %s7, 1
      %p112 = scmp.lt.s32.totalorder %s16, 1
      %s113 = scalar_select %p112, %s16, 1
      %p114 = scmp.lt.s32.totalorder %s17, 0
      %s115 = scalar_select %p114, %s17, 0
      %s116 = smul.addr %s115, 2
      %s117 = smul.addr %s113, 2
      %s118 = sadd.s32 %s116, %s117
      %s119 = scalar_lea.vmem %s0, %s118
      %p120 = pneg %p47
      %p121 = pneg %p44
      %p122 = pneg %p75
      %p123 = pneg %p72
      %p124 = scmp.lt.s32.totalorder %s16, 1
      %s125 = scalar_select %p124, %s16, 1
      %p126 = scmp.lt.s32.totalorder %s17, 0
      %s127 = scalar_select %p126, %s17, 0
      %s128 = smul.addr %s127, 2
      %s129 = smul.addr %s125, 2
      %s130 = sadd.s32 %s128, %s129
      %s131 = scalar_lea.vmem %s1, %s130
      %p132 = scmp.lt.s32.totalorder %s16, 1
      %s133 = scalar_select %p132, %s16, 1
      %p134 = scmp.lt.s32.totalorder %s17, 0
      %s135 = scalar_select %p134, %s17, 0
      %s136 = smul.addr %s135, 2
      %s137 = smul.addr %s133, 2
      %s138 = sadd.s32 %s136, %s137
      %s139 = scalar_lea.vmem %s0, %s138
      %p140 = scmp.lt.s32.totalorder %s16, 1
      %s141 = scalar_select %p140, %s16, 1
      %p142 = scmp.lt.s32.totalorder %s17, 0
      %s143 = scalar_select %p142, %s17, 0
      %s144 = smul.addr %s143, 2
      %s145 = smul.addr %s141, 2
      %s146 = sadd.s32 %s144, %s145
      %s147 = scalar_lea.vmem %s1, %s146
      %v148 = vlaneseq
      %v149 = vshrl.u32 %v148, 7
      %v150 = vstv %s17
      %v151 = vadd.s32 %v150, %v149
      %v152 = vlaneseq
      %v153 = vand.u32 %v152, 127
      %v154 = vadd.s32 %v153, 128
      %v155 = vmul.u32 %v151, 8
      %v156 = vshra.s32 %v153, 5
      %v157 = vshra.s32 %v154, 5
      %v158 = vadd.s32 %v155, %v156
      %v159 = vadd.s32 %v155, %v157
      %v160 = vand.u32 %v153, 31
      %v161 = vand.u32 %v154, 31
      %v162 = vshra.s32 %v160, 1
      %v163 = vshra.s32 %v161, 1
      %v164 = vshll.u32 %v162, 1
      %v165 = vshll.u32 %v163, 1
      %v166 = vcvt.s32.f32 %v164
      %v167 = vcvt.s32.f32 %v165
      %v168 = vmul.f32 %v166, -0.28782314
      %v169 = vmul.f32 %v167, -0.28782314
      %v170 = vmul.f32 %v168, 1.442695
      %v171 = vpow.pop %v170
      %v172 = vmul.f32 %v169, 1.442695
      %v173 = vpow.pop %v172
      %v174 = vcvt.s32.f32 %v158
      %v175 = vcvt.s32.f32 %v159
      %v176 = vmul.f32 %v174, %v171
      %v177 = vmul.f32 %v175, %v173
      %v178 = vand.u32 %v160, 1
      %v179 = vand.u32 %v161, 1
      %vm180 = vcmp.eq.s32.totalorder %v178, 0
      %vm181 = vcmp.eq.s32.totalorder %v179, 0
      %v182 = vand.u32 2147483647, %v176
      %vm183 = vcmp.le.f32.partialorder %v182, 0.7853982
      %vm184 = vcmp.lt.s32.totalorder %v176, 0
      %v185 = vand.u32 %v176, 2139095040
      %v186 = vshrl.u32 %v185, 23
      %v187 = vsub.s32 %v186, 127
      %v188 = vand.u32 2147483647, %v176
      %v189 = vand.u32 %v188, 8388607
      %v190 = vor.u32 %v189, 8388608
      %v191 = vsub.s32 0, %v190
      %v192 = vadd.s32 %v187, 1
      %vm193 = vcmp.gt.s32.totalorder %v192, 0
      %v194 = vsel %vm193, %v192, 0
      %v195 = vshrl.u32 %v194, 5
      %v196 = vand.u32 %v194, 31
      %v197 = vsub.s32 32, %v196
      %v198 = vshrl.u32 683565275, %v197
      %v199 = vshll.u32 683565275, %v196
      %v200 = vshrl.u32 2475754826, %v197
      %v201 = vor.u32 %v199, %v200
      %v202 = vshll.u32 2475754826, %v196
      %v203 = vshrl.u32 2131351028, %v197
      %v204 = vor.u32 %v202, %v203
      %v205 = vshll.u32 2131351028, %v196
      %v206 = vshrl.u32 2102212464, %v197
      %v207 = vor.u32 %v205, %v206
      %v208 = vshll.u32 2102212464, %v196
      %v209 = vshrl.u32 920167782, %v197
      %v210 = vor.u32 %v208, %v209
      %v211 = vshll.u32 920167782, %v196
      %v212 = vshrl.u32 1326507024, %v197
      %v213 = vor.u32 %v211, %v212
      %vm214 = vcmp.lt.s32.totalorder %v195, 1
      %vm215 = vcmp.lt.s32.totalorder %v195, 2
      %vm216 = vcmp.lt.s32.totalorder %v195, 3
      %vm217 = vcmp.lt.s32.totalorder %v195, 4
      %v218 = vsel %vm214, %v198, %v201
      %v219 = vsel %vm217, %v207, 2102212464
      %v220 = vsel %vm216, %v204, %v219
      %v221 = vsel %vm215, %v218, %v220
      %v222 = vsel %vm214, %v201, %v204
      %v223 = vsel %vm217, %v210, 920167782
      %v224 = vsel %vm216, %v207, %v223
      %v225 = vsel %vm215, %v222, %v224
      %v226 = vsel %vm214, %v204, %v207
      %v227 = vsel %vm217, %v213, 1326507024
      %v228 = vsel %vm216, %v210, %v227
      %v229 = vsel %vm215, %v226, %v228
      %v230 = vshll.u32 %v190, 8
      %v231 = vmul.u32.u64.compose %v230, %v229
      %v232 = vextract.low.u32 %v231
      %v233 = vextract.high.u32 %v231
      %v234 = vmul.u32.u64.compose %v230, %v225
      %v235 = vextract.low.u32 %v234
      %v236 = vextract.high.u32 %v234
      %v237 = vmul.u32 %v230, %v221
      %v238 = vadd.s32 %v233, %v235
      %vm239 = vc.u32 %v233, %v235
      %v240 = vadd.s32 %v236, 1
      %v241 = vsel %vm239, %v240, %v236
      %v242 = vadd.s32 %v237, %v241
      %v243 = vadd.s32 %v242, 536870912
      %v244 = vshrl.u32 %v243, 30
      %v245 = vshll.u32 %v244, 30
      %v246 = vsub.s32 %v242, %v245
      %vm247 = vcmp.lt.s32.totalorder %v246, 0
      %v248 = vsub.s32 0, %v246
      %v249 = vsel %vm247, %v248, %v246
      %v250 = vclz %v249
      %v251 = vsub.s32 %v250, 2
      %vm252 = vcmp.gt.s32.totalorder 0, %v251
      %v253 = vsel %vm252, 0, %v251
      %v254 = vsub.s32 32, %v253
      %v255 = vshll.u32 %v246, %v253
      %v256 = vshrl.u32 %v238, %v254
      %v257 = vor.u32 %v255, %v256
      %v258 = vsub.s32 4294967266, %v253
      %v259 = vadd.s32 %v258, 127
      %v260 = vshll.u32 %v259, 23
      %v261 = vor.u32 4788187, %v260
      %v262 = vand.u32 2147483647, %v261
      %v264 = vcvt.s32.f32 %v257
      %v265 = vmul.f32 %v264, %v262
      %v266 = vxor.u32 %v265, 2147483648
      %v267 = vsel %vm184, %v266, %v265
      %v268 = vsub.s32 4, %v244
      %v269 = vsel %vm184, %v268, %v244
      %v270 = vsel %vm183, %v176, %v267
      %v271 = vsel %vm183, 0, %v269
      %v272 = vcosq.f32.pop %v270
      %v273 = vsinq.f32.pop %v270
      %vm274 = vweird.f32 %v176
      %v275 = vadd.s32 %v271, 3
      %v276 = vand.u32 %v275, 3
      %vm277 = vcmp.lt.s32.totalorder %v276, 2
      %vm278 = vcmp.eq.s32.totalorder %v276, 0
      %v279 = vxor.u32 %v273, 2147483648
      %v280 = vsel %vm278, %v272, %v279
      %vm281 = vcmp.eq.s32.totalorder %v276, 2
      %v282 = vxor.u32 %v272, 2147483648
      %v283 = vsel %vm281, %v282, %v273
      %v284 = vsel %vm277, %v280, %v283
      %v285 = vsel %vm274, nan, %v284
      %v286 = vand.u32 2147483647, %v177
      %vm287 = vcmp.le.f32.partialorder %v286, 0.7853982
      %vm288 = vcmp.lt.s32.totalorder %v177, 0
      %v289 = vand.u32 %v177, 2139095040
      %v290 = vshrl.u32 %v289, 23
      %v291 = vsub.s32 %v290, 127
      %v292 = vand.u32 2147483647, %v177
      %v293 = vand.u32 %v292, 8388607
      %v294 = vor.u32 %v293, 8388608
      %v295 = vsub.s32 0, %v294
      %v296 = vadd.s32 %v291, 1
      %vm297 = vcmp.gt.s32.totalorder %v296, 0
      %v298 = vsel %vm297, %v296, 0
      %v299 = vshrl.u32 %v298, 5
      %v300 = vand.u32 %v298, 31
      %v301 = vsub.s32 32, %v300
      %v302 = vshrl.u32 683565275, %v301
      %v303 = vshll.u32 683565275, %v300
      %v304 = vshrl.u32 2475754826, %v301
      %v305 = vor.u32 %v303, %v304
      %v306 = vshll.u32 2475754826, %v300
      %v307 = vshrl.u32 2131351028, %v301
      %v308 = vor.u32 %v306, %v307
      %v309 = vshll.u32 2131351028, %v300
      %v310 = vshrl.u32 2102212464, %v301
      %v311 = vor.u32 %v309, %v310
      %v312 = vshll.u32 2102212464, %v300
      %v313 = vshrl.u32 920167782, %v301
      %v314 = vor.u32 %v312, %v313
      %v315 = vshll.u32 920167782, %v300
      %v316 = vshrl.u32 1326507024, %v301
      %v317 = vor.u32 %v315, %v316
      %vm318 = vcmp.lt.s32.totalorder %v299, 1
      %vm319 = vcmp.lt.s32.totalorder %v299, 2
      %vm320 = vcmp.lt.s32.totalorder %v299, 3
      %vm321 = vcmp.lt.s32.totalorder %v299, 4
      %v322 = vsel %vm318, %v302, %v305
      %v323 = vsel %vm321, %v311, 2102212464
      %v324 = vsel %vm320, %v308, %v323
      %v325 = vsel %vm319, %v322, %v324
      %v326 = vsel %vm318, %v305, %v308
      %v327 = vsel %vm321, %v314, 920167782
      %v328 = vsel %vm320, %v311, %v327
      %v329 = vsel %vm319, %v326, %v328
      %v330 = vsel %vm318, %v308, %v311
      %v331 = vsel %vm321, %v317, 1326507024
      %v332 = vsel %vm320, %v314, %v331
      %v333 = vsel %vm319, %v330, %v332
      %v334 = vshll.u32 %v294, 8
      %v335 = vmul.u32.u64.compose %v334, %v333
      %v336 = vextract.low.u32 %v335
      %v337 = vextract.high.u32 %v335
      %v338 = vmul.u32.u64.compose %v334, %v329
      %v339 = vextract.low.u32 %v338
      %v340 = vextract.high.u32 %v338
      %v341 = vmul.u32 %v334, %v325
      %v342 = vadd.s32 %v337, %v339
      %vm343 = vc.u32 %v337, %v339
      %v344 = vadd.s32 %v340, 1
      %v345 = vsel %vm343, %v344, %v340
      %v346 = vadd.s32 %v341, %v345
      %v347 = vadd.s32 %v346, 536870912
      %v348 = vshrl.u32 %v347, 30
      %v349 = vshll.u32 %v348, 30
      %v350 = vsub.s32 %v346, %v349
      %vm351 = vcmp.lt.s32.totalorder %v350, 0
      %v352 = vsub.s32 0, %v350
      %v353 = vsel %vm351, %v352, %v350
      %v354 = vclz %v353
      %v355 = vsub.s32 %v354, 2
      %vm356 = vcmp.gt.s32.totalorder 0, %v355
      %v357 = vsel %vm356, 0, %v355
      %v358 = vsub.s32 32, %v357
      %v359 = vshll.u32 %v350, %v357
      %v360 = vshrl.u32 %v342, %v358
      %v361 = vor.u32 %v359, %v360
      %v362 = vsub.s32 4294967266, %v357
      %v363 = vadd.s32 %v362, 127
      %v364 = vshll.u32 %v363, 23
      %v365 = vor.u32 4788187, %v364
      %v366 = vand.u32 2147483647, %v365
      %v368 = vcvt.s32.f32 %v361
      %v369 = vmul.f32 %v368, %v366
      %v370 = vxor.u32 %v369, 2147483648
      %v371 = vsel %vm288, %v370, %v369
      %v372 = vsub.s32 4, %v348
      %v373 = vsel %vm288, %v372, %v348
      %v374 = vsel %vm287, %v177, %v371
      %v375 = vsel %vm287, 0, %v373
      %v376 = vcosq.f32.pop %v374
      %v377 = vsinq.f32.pop %v374
      %vm378 = vweird.f32 %v177
      %v379 = vadd.s32 %v375, 3
      %v380 = vand.u32 %v379, 3
      %vm381 = vcmp.lt.s32.totalorder %v380, 2
      %vm382 = vcmp.eq.s32.totalorder %v380, 0
      %v383 = vxor.u32 %v377, 2147483648
      %v384 = vsel %vm382, %v376, %v383
      %vm385 = vcmp.eq.s32.totalorder %v380, 2
      %v386 = vxor.u32 %v376, 2147483648
      %v387 = vsel %vm385, %v386, %v377
      %v388 = vsel %vm381, %v384, %v387
      %v389 = vsel %vm378, nan, %v388
      %v390 = vand.u32 2147483647, %v176
      %vm391 = vcmp.le.f32.partialorder %v390, 0.7853982
      %vm392 = vcmp.lt.s32.totalorder %v176, 0
      %v393 = vand.u32 %v176, 2139095040
      %v394 = vshrl.u32 %v393, 23
      %v395 = vsub.s32 %v394, 127
      %v396 = vand.u32 2147483647, %v176
      %v397 = vand.u32 %v396, 8388607
      %v398 = vor.u32 %v397, 8388608
      %v399 = vsub.s32 0, %v398
      %v400 = vadd.s32 %v395, 1
      %vm401 = vcmp.gt.s32.totalorder %v400, 0
      %v402 = vsel %vm401, %v400, 0
      %v403 = vshrl.u32 %v402, 5
      %v404 = vand.u32 %v402, 31
      %v405 = vsub.s32 32, %v404
      %v406 = vshrl.u32 683565275, %v405
      %v407 = vshll.u32 683565275, %v404
      %v408 = vshrl.u32 2475754826, %v405
      %v409 = vor.u32 %v407, %v408
      %v410 = vshll.u32 2475754826, %v404
      %v411 = vshrl.u32 2131351028, %v405
      %v412 = vor.u32 %v410, %v411
      %v413 = vshll.u32 2131351028, %v404
      %v414 = vshrl.u32 2102212464, %v405
      %v415 = vor.u32 %v413, %v414
      %v416 = vshll.u32 2102212464, %v404
      %v417 = vshrl.u32 920167782, %v405
      %v418 = vor.u32 %v416, %v417
      %v419 = vshll.u32 920167782, %v404
      %v420 = vshrl.u32 1326507024, %v405
      %v421 = vor.u32 %v419, %v420
      %vm422 = vcmp.lt.s32.totalorder %v403, 1
      %vm423 = vcmp.lt.s32.totalorder %v403, 2
      %vm424 = vcmp.lt.s32.totalorder %v403, 3
      %vm425 = vcmp.lt.s32.totalorder %v403, 4
      %v426 = vsel %vm422, %v406, %v409
      %v427 = vsel %vm425, %v415, 2102212464
      %v428 = vsel %vm424, %v412, %v427
      %v429 = vsel %vm423, %v426, %v428
      %v430 = vsel %vm422, %v409, %v412
      %v431 = vsel %vm425, %v418, 920167782
      %v432 = vsel %vm424, %v415, %v431
      %v433 = vsel %vm423, %v430, %v432
      %v434 = vsel %vm422, %v412, %v415
      %v435 = vsel %vm425, %v421, 1326507024
      %v436 = vsel %vm424, %v418, %v435
      %v437 = vsel %vm423, %v434, %v436
      %v438 = vshll.u32 %v398, 8
      %v439 = vmul.u32.u64.compose %v438, %v437
      %v440 = vextract.low.u32 %v439
      %v441 = vextract.high.u32 %v439
      %v442 = vmul.u32.u64.compose %v438, %v433
      %v443 = vextract.low.u32 %v442
      %v444 = vextract.high.u32 %v442
      %v445 = vmul.u32 %v438, %v429
      %v446 = vadd.s32 %v441, %v443
      %vm447 = vc.u32 %v441, %v443
      %v448 = vadd.s32 %v444, 1
      %v449 = vsel %vm447, %v448, %v444
      %v450 = vadd.s32 %v445, %v449
      %v451 = vadd.s32 %v450, 536870912
      %v452 = vshrl.u32 %v451, 30
      %v453 = vshll.u32 %v452, 30
      %v454 = vsub.s32 %v450, %v453
      %vm455 = vcmp.lt.s32.totalorder %v454, 0
      %v456 = vsub.s32 0, %v454
      %v457 = vsel %vm455, %v456, %v454
      %v458 = vclz %v457
      %v459 = vsub.s32 %v458, 2
      %vm460 = vcmp.gt.s32.totalorder 0, %v459
      %v461 = vsel %vm460, 0, %v459
      %v462 = vsub.s32 32, %v461
      %v463 = vshll.u32 %v454, %v461
      %v464 = vshrl.u32 %v446, %v462
      %v465 = vor.u32 %v463, %v464
      %v466 = vsub.s32 4294967266, %v461
      %v467 = vadd.s32 %v466, 127
      %v468 = vshll.u32 %v467, 23
      %v469 = vor.u32 4788187, %v468
      %v470 = vand.u32 2147483647, %v469
      %v472 = vcvt.s32.f32 %v465
      %v473 = vmul.f32 %v472, %v470
      %v474 = vxor.u32 %v473, 2147483648
      %v475 = vsel %vm392, %v474, %v473
      %v476 = vsub.s32 4, %v452
      %v477 = vsel %vm392, %v476, %v452
      %v478 = vsel %vm391, %v176, %v475
      %v479 = vsel %vm391, 0, %v477
      %v480 = vcosq.f32.pop %v478
      %v481 = vsinq.f32.pop %v478
      %vm482 = vweird.f32 %v176
      %v483 = vand.u32 %v479, 3
      %vm484 = vcmp.lt.s32.totalorder %v483, 2
      %vm485 = vcmp.eq.s32.totalorder %v483, 0
      %v486 = vxor.u32 %v481, 2147483648
      %v487 = vsel %vm485, %v480, %v486
      %vm488 = vcmp.eq.s32.totalorder %v483, 2
      %v489 = vxor.u32 %v480, 2147483648
      %v490 = vsel %vm488, %v489, %v481
      %v491 = vsel %vm484, %v487, %v490
      %v492 = vsel %vm482, nan, %v491
      %v493 = vand.u32 2147483647, %v177
      %vm494 = vcmp.le.f32.partialorder %v493, 0.7853982
      %vm495 = vcmp.lt.s32.totalorder %v177, 0
      %v496 = vand.u32 %v177, 2139095040
      %v497 = vshrl.u32 %v496, 23
      %v498 = vsub.s32 %v497, 127
      %v499 = vand.u32 2147483647, %v177
      %v500 = vand.u32 %v499, 8388607
      %v501 = vor.u32 %v500, 8388608
      %v502 = vsub.s32 0, %v501
      %v503 = vadd.s32 %v498, 1
      %vm504 = vcmp.gt.s32.totalorder %v503, 0
      %v505 = vsel %vm504, %v503, 0
      %v506 = vshrl.u32 %v505, 5
      %v507 = vand.u32 %v505, 31
      %v508 = vsub.s32 32, %v507
      %v509 = vshrl.u32 683565275, %v508
      %v510 = vshll.u32 683565275, %v507
      %v511 = vshrl.u32 2475754826, %v508
      %v512 = vor.u32 %v510, %v511
      %v513 = vshll.u32 2475754826, %v507
      %v514 = vshrl.u32 2131351028, %v508
      %v515 = vor.u32 %v513, %v514
      %v516 = vshll.u32 2131351028, %v507
      %v517 = vshrl.u32 2102212464, %v508
      %v518 = vor.u32 %v516, %v517
      %v519 = vshll.u32 2102212464, %v507
      %v520 = vshrl.u32 920167782, %v508
      %v521 = vor.u32 %v519, %v520
      %v522 = vshll.u32 920167782, %v507
      %v523 = vshrl.u32 1326507024, %v508
      %v524 = vor.u32 %v522, %v523
      %vm525 = vcmp.lt.s32.totalorder %v506, 1
      %vm526 = vcmp.lt.s32.totalorder %v506, 2
      %vm527 = vcmp.lt.s32.totalorder %v506, 3
      %vm528 = vcmp.lt.s32.totalorder %v506, 4
      %v529 = vsel %vm525, %v509, %v512
      %v530 = vsel %vm528, %v518, 2102212464
      %v531 = vsel %vm527, %v515, %v530
      %v532 = vsel %vm526, %v529, %v531
      %v533 = vsel %vm525, %v512, %v515
      %v534 = vsel %vm528, %v521, 920167782
      %v535 = vsel %vm527, %v518, %v534
      %v536 = vsel %vm526, %v533, %v535
      %v537 = vsel %vm525, %v515, %v518
      %v538 = vsel %vm528, %v524, 1326507024
      %v539 = vsel %vm527, %v521, %v538
      %v540 = vsel %vm526, %v537, %v539
      %v541 = vshll.u32 %v501, 8
      %v542 = vmul.u32.u64.compose %v541, %v540
      %v543 = vextract.low.u32 %v542
      %v544 = vextract.high.u32 %v542
      %v545 = vmul.u32.u64.compose %v541, %v536
      %v546 = vextract.low.u32 %v545
      %v547 = vextract.high.u32 %v545
      %v548 = vmul.u32 %v541, %v532
      %v549 = vadd.s32 %v544, %v546
      %vm550 = vc.u32 %v544, %v546
      %v551 = vadd.s32 %v547, 1
      %v552 = vsel %vm550, %v551, %v547
      %v553 = vadd.s32 %v548, %v552
      %v554 = vadd.s32 %v553, 536870912
      %v555 = vshrl.u32 %v554, 30
      %v556 = vshll.u32 %v555, 30
      %v557 = vsub.s32 %v553, %v556
      %vm558 = vcmp.lt.s32.totalorder %v557, 0
      %v559 = vsub.s32 0, %v557
      %v560 = vsel %vm558, %v559, %v557
      %v561 = vclz %v560
      %v562 = vsub.s32 %v561, 2
      %vm563 = vcmp.gt.s32.totalorder 0, %v562
      %v564 = vsel %vm563, 0, %v562
      %v565 = vsub.s32 32, %v564
      %v566 = vshll.u32 %v557, %v564
      %v567 = vshrl.u32 %v549, %v565
      %v568 = vor.u32 %v566, %v567
      %v569 = vsub.s32 4294967266, %v564
      %v570 = vadd.s32 %v569, 127
      %v571 = vshll.u32 %v570, 23
      %v572 = vor.u32 4788187, %v571
      %v573 = vand.u32 2147483647, %v572
      %v575 = vcvt.s32.f32 %v568
      %v576 = vmul.f32 %v575, %v573
      %v577 = vxor.u32 %v576, 2147483648
      %v578 = vsel %vm495, %v577, %v576
      %v579 = vsub.s32 4, %v555
      %v580 = vsel %vm495, %v579, %v555
      %v581 = vsel %vm494, %v177, %v578
      %v582 = vsel %vm494, 0, %v580
      %v583 = vcosq.f32.pop %v581
      %v584 = vsinq.f32.pop %v581
      %vm585 = vweird.f32 %v177
      %v586 = vand.u32 %v582, 3
      %vm587 = vcmp.lt.s32.totalorder %v586, 2
      %vm588 = vcmp.eq.s32.totalorder %v586, 0
      %v589 = vxor.u32 %v584, 2147483648
      %v590 = vsel %vm588, %v583, %v589
      %vm591 = vcmp.eq.s32.totalorder %v586, 2
      %v592 = vxor.u32 %v583, 2147483648
      %v593 = vsel %vm591, %v592, %v584
      %v594 = vsel %vm587, %v590, %v593
      %v595 = vsel %vm585, nan, %v594
      %v596 = vsel %vm180, %v285, %v492
      %v597 = vsel %vm181, %v389, %v595
      %v598 = vld [vmem:[%s139] sm:$0x3]
      %v601 = vcombine.low %v596, %v597
      %v603 = vunpack.c.l.s4 1966171168
      %v604 = vunpack.c.0.s8 %v603
      %v605 = vlaneseq
      %v606 = vshrl.u32 %v605, 7
      %v607 = vsub.s32 %v604, %v606
      %v608 = vrot.slane %v601, %v607
      %v610 = vunpack.c.l.s4 1966171168
      %v611 = vunpack.c.0.s8 %v610
      %v612 = vlaneseq
      %v613 = vshrl.u32 %v612, 7
      %v614 = vsub.s32 %v611, %v613
      %v615 = vrot.slane %v608, %v614
      %v617 = vadd.f32 %v598, %v615
      %v618 = vlaneseq
      %vm619 = vcmp.ge.s32.totalorder %v618, 0
      %vm620 = vcmp.lt.s32.totalorder %v618, 256
      %vm621 = vmand %vm619, %vm620
      %622 = vst.msk [vmem:[%s147] sm:$0x3] %vm621, %v617
      %p623 = scmp.lt.s32.totalorder %s16, 1
      %s624 = scalar_select %p623, %s16, 1
      %p625 = scmp.lt.s32.totalorder %s17, 0
      %s626 = scalar_select %p625, %s17, 0
      %s627 = smul.addr %s626, 2
      %s628 = smul.addr %s624, 2
      %s629 = sadd.s32 %s627, %s628
      %s630 = scalar_lea.vmem %s1, %s629
      // Predicated region
      $region25: #{_pe_forward_btd_folded.1} parent=23 // pred_check
        %p631 = pneg %p72
      $region26: #{_pe_forward_btd_folded.1} parent=23 // pred_check_branch
        %633 = sbr.rel (%p631) target = $region28
      $region27: #{_pe_forward_btd_folded.1} parent=23 // pred_region
        _
      $region28: #{_pe_forward_btd_folded.1} parent=23 // pred_fallthru
        _
    $region24: #{_pe_forward_btd_folded.1} parent=5 // pred_fallthru
      _
    %p634 = scmp.le.s32.totalorder 2, %s7
    // Predicated region
    $region29: #{_pe_forward_btd_folded.1} parent=5 // pred_check
      %p635 = pneg %p634
    $region30: #{_pe_forward_btd_folded.1} parent=5 // pred_check_branch
      %637 = sbr.rel (%p635) target = $region32
    $region31: #{_pe_forward_btd_folded.1} parent=5 // pred_region
      %s638 = ssub.s32 %s7, 2
      // Predicated region
      $region33: #{_pe_forward_btd_folded.1} parent=31 // pred_check
        %p639 = pneg %p78
      $region34: #{_pe_forward_btd_folded.1} parent=31 // pred_check_branch
        %641 = sbr.rel (%p639) target = $region36
      $region35: #{_pe_forward_btd_folded.1} parent=31 // pred_region
        %p642 = scmp.lt.s32.totalorder %s18, 1
        %s643 = scalar_select %p642, %s18, 1
        %p644 = scmp.lt.s32.totalorder %s19, 0
        %s645 = scalar_select %p644, %s19, 0
        %s646 = smul.addr %s645, 2
        %s647 = smul.addr %s643, 2
        %s648 = sadd.s32 %s646, %s647
        %s649 = scalar_lea.vmem %s1, %s648
      $region36: #{_pe_forward_btd_folded.1} parent=31 // pred_fallthru
        _
    $region32: #{_pe_forward_btd_folded.1} parent=5 // pred_fallthru
      _
  $region6: #{_pe_forward_btd_folded.1} parent=0 // loop_footer
    %s11 = sadd.s32 1, %s7
  $region7: #{_pe_forward_btd_folded.1} parent=0 // loop_footer_branch
    %6 = sbr.rel target = $region3
  $region8: #{_pe_forward_btd_folded.1} parent=0 // loop_exit
    _

</llo_original>
